<compile_context>
chip_gen: v5e
topology: v5e:2x2
jax: 0.10.0
libtpu: 0.0.40
codegen_flags: <defaults>
</compile_context>

<pallas_src>
import functools

import jax
import jax.numpy as jnp
from jax import lax
from jax.experimental import pallas as pl
from jax.experimental.pallas import tpu as pltpu

MAX_ROW_TILE = 256  # packed rows per grid step (= 1024 tokens when d == 32)


def _round_up(x, m):
    return ((x + m - 1) // m) * m


def _emb_dropout_kernel(ids_ref, table_ref, out_ref, *,
                        row_tile, kvocab, packed_w, dropout_rate, seed):
    """One grid step: gather `row_tile * K` token embeddings + dropout.

    ids_ref   : VMEM (row_tile, K) int32, slot-offset ids (id + slot*vocab)
    table_ref : VMEM (K*vocab, K*d) block-diagonal replicated embedding table
    out_ref   : VMEM (row_tile, K*d) packed, lane-dense output tile
    """
    ids = ids_ref[...]                       # (row_tile, K) int32
    k_slots = ids.shape[1]

    # --- vectorized gather: one-hot (row_tile, K*vocab) built on the VPU ----
    lanes = lax.broadcasted_iota(jnp.int32, (row_tile, kvocab), 1)
    onehot = jnp.zeros((row_tile, kvocab), jnp.float32)
    for s in range(k_slots):                 # static, tiny (K <= 4)
        onehot = onehot + (lanes == ids[:, s:s + 1]).astype(jnp.float32)

    # --- MXU matmul: exact row selection (one-hot is exact in bf16 passes,
    #     HIGHEST precision reconstructs full f32 table values) --------------
    packed = jnp.dot(onehot, table_ref[...].astype(jnp.float32),
                     preferred_element_type=jnp.float32,
                     precision=lax.Precision.HIGHEST)   # (row_tile, packed_w)

    # --- dropout: stateless counter-hash PRNG at full lane width ------------
    if dropout_rate > 0.0:
        keep_prob = 1.0 - dropout_rate
        # integer keep threshold on the hash's top 24 bits (bias < 2^-24)
        keep_thresh = jnp.int32(int(keep_prob * (1 << 24)))
        r = lax.broadcasted_iota(jnp.int32, (row_tile, packed_w), 0)
        c = lax.broadcasted_iota(jnp.int32, (row_tile, packed_w), 1)
        # unique 32-bit counter per output element across the whole grid
        idx = (pl.program_id(0) * row_tile + r) * packed_w + c
        x = idx.astype(jnp.uint32) * jnp.uint32(0x9E3779B1) + jnp.uint32(seed)
        # lowbias32 finalizer: decorrelates consecutive counters / seeds
        x = x ^ (x >> jnp.uint32(16))
        x = x * jnp.uint32(0x7FEB352D)
        x = x ^ (x >> jnp.uint32(15))
        x = x * jnp.uint32(0x846CA68B)
        x = x ^ (x >> jnp.uint32(16))
        # top 24 bits -> non-negative int32; keep iff below integer threshold
        u = (x >> jnp.uint32(8)).astype(jnp.int32)
        keep = u < keep_thresh
        packed = jnp.where(keep, packed * jnp.float32(1.0 / keep_prob),
                           jnp.float32(0.0))

    out_ref[...] = packed.astype(out_ref.dtype)


def embedding_layer_forward(ids, table, *, dropout_rate, seed, training=True):
    """Pallas equivalent of EmbeddingLayer.forward.

    ids   : int array, shape [sent_len] or [batch, sent_len]
    table : float [vocab, input_dim] embedding matrix (nn.Embedding.weight)
    """
    orig_shape = ids.shape
    flat = ids.reshape(-1).astype(jnp.int32)
    n = flat.shape[0]
    vocab, d = table.shape

    # lane-packing factor: pack K tokens per 128-wide output row when d < 128
    k_pack = 128 // d if (d < 128 and 128 % d == 0) else 1
    packed_w = k_pack * d

    rows_needed = -(-n // k_pack)                      # ceil-div
    row_tile = min(MAX_ROW_TILE, _round_up(rows_needed, 8))
    rows = _round_up(rows_needed, row_tile)
    n_pad = rows * k_pack

    # pad ids (pad token 0 -> valid row; padded outputs are sliced off below)
    ids_pad = jnp.zeros((n_pad,), jnp.int32).at[:n].set(flat)
    # offset slot s within a packed row by s*vocab so one one-hot over
    # K*vocab lanes selects from the block-diagonal table
    slot_off = (jnp.arange(n_pad, dtype=jnp.int32) % k_pack) * vocab
    ids_off = (ids_pad + slot_off).reshape(rows, k_pack)

    # block-diagonal replicated table (K*vocab, K*d); == table when K == 1
    if k_pack == 1:
        big_table = table
    else:
        big_table = jnp.kron(jnp.eye(k_pack, dtype=table.dtype), table)

    rate = float(dropout_rate) if training else 0.0
    kernel = functools.partial(
        _emb_dropout_kernel,
        row_tile=row_tile, kvocab=k_pack * vocab, packed_w=packed_w,
        dropout_rate=rate, seed=int(seed) & 0xFFFFFFFF)

    out = pl.pallas_call(
        kernel,
        out_shape=jax.ShapeDtypeStruct((rows, packed_w), table.dtype),
        grid=(rows // row_tile,),
        in_specs=[
            pl.BlockSpec((row_tile, k_pack), lambda i: (i, 0)),      # ids (VMEM)
            pl.BlockSpec((k_pack * vocab, packed_w), lambda i: (0, 0)),  # table
        ],
        out_specs=pl.BlockSpec((row_tile, packed_w), lambda i: (i, 0)),
        compiler_params=pltpu.CompilerParams(
            dimension_semantics=("parallel",)),   # stateless PRNG -> order-free
    )(ids_off, big_table)

    emb = out.reshape(n_pad, d)[:n]
    return emb.reshape(*orig_shape, d)


if __name__ == "__main__":
    key = jax.random.PRNGKey(0)
    k_table, k_ids = jax.random.split(key)

    vocab, input_dim = 64, 32        # full_dict_size, input_dim
    batch, sent_len = 2, 8
    dropout_rate = 0.2

    table = (jax.random.normal(k_table, (vocab, input_dim), dtype=jnp.float32)
             * 0.1)
    ids = jax.random.randint(k_ids, (batch, sent_len), 0, vocab,
                             dtype=jnp.int32)

    # eval mode (dropout disabled): exact embedding-lookup semantics
    out_eval = embedding_layer_forward(
        ids, table, dropout_rate=dropout_rate, seed=0, training=False)
    out_eval = jax.block_until_ready(out_eval)
    ref = jnp.take(table, ids, axis=0)
    assert out_eval.shape == (batch, sent_len, input_dim)
    assert jnp.allclose(out_eval, ref, atol=1e-6), "embedding gather mismatch"

    # non-batched input path ([sent_len] -> [sent_len, input_dim])
    out_1d = embedding_layer_forward(
        ids[0], table, dropout_rate=dropout_rate, seed=0, training=False)
    out_1d = jax.block_until_ready(out_1d)
    assert out_1d.shape == (sent_len, input_dim)
    assert jnp.allclose(out_1d, ref[0], atol=1e-6), "non-batched gather mismatch"

    # training mode (dropout active, deterministic in-kernel hash PRNG)
    out_train = embedding_layer_forward(
        ids, table, dropout_rate=dropout_rate, seed=1234, training=True)
    out_train = jax.block_until_ready(out_train)
    assert out_train.shape == (batch, sent_len, input_dim)

    # kept elements must equal ref * 1/(1-p); dropped elements must be 0
    scale = 1.0 / (1.0 - dropout_rate)
    kept = out_train != 0
    assert jnp.allclose(jnp.where(kept, out_train, ref * scale), ref * scale,
                        atol=1e-5), "dropout scaling mismatch"
    drop_frac = float(jnp.mean((~kept).astype(jnp.float32)))
    assert 0.02 < drop_frac < 0.6, f"implausible dropout fraction {drop_frac}"

    print("KERNEL_OK")
</pallas_src>

<mosaic_0001>
module attributes {stable_mosaic.version = 11 : i64} {
  func.func @_emb_dropout_kernel(%arg0: i32, %arg1: memref<8x4xi32, #tpu.memory_space<vmem>>, %arg2: memref<256x128xf32, #tpu.memory_space<vmem>>, %arg3: memref<8x128xf32, #tpu.memory_space<vmem>>) attributes {dimension_semantics = [#tpu.dimension_semantics<parallel>], iteration_bounds = array<i64: 1>, scalar_prefetch = 0 : i64, scratch_operands = 0 : i64, tpu.core_type = #tpu.core_type<tc>, window_params = [{transform_indices = @transform_0, window_bounds = array<i64: 8, 4>}, {pipeline_mode = #tpu.pipeline_mode<synchronous>, transform_indices = @transform_1, window_bounds = array<i64: 256, 128>}, {transform_indices = @transform_2, window_bounds = array<i64: 8, 128>}]} {
    %c0 = arith.constant 0 : index
    %c0_0 = arith.constant 0 : index
    %0 = vector.load %arg1[%c0, %c0_0] : memref<8x4xi32, #tpu.memory_space<vmem>>, vector<8x4xi32>
    %1 = tpu.iota {dimensions = array<i32: 1>} : vector<8x256xi32>
    %cst = arith.constant 0.000000e+00 : f32
    %2 = vector.broadcast %cst : f32 to vector<8x256xf32>
    %3 = vector.extract_strided_slice %0 {offsets = [0, 0], sizes = [8, 1], strides = [1, 1]} : vector<8x4xi32> to vector<8x1xi32>
    %4 = vector.broadcast %3 : vector<8x1xi32> to vector<8x256xi32>
    %5 = arith.cmpi eq, %1, %4 : vector<8x256xi32>
    %6 = arith.extui %5 : vector<8x256xi1> to vector<8x256xi32>
    %7 = arith.sitofp %6 : vector<8x256xi32> to vector<8x256xf32>
    %8 = arith.addf %2, %7 : vector<8x256xf32>
    %9 = vector.extract_strided_slice %0 {offsets = [0, 1], sizes = [8, 1], strides = [1, 1]} : vector<8x4xi32> to vector<8x1xi32>
    %10 = vector.broadcast %9 : vector<8x1xi32> to vector<8x256xi32>
    %11 = arith.cmpi eq, %1, %10 : vector<8x256xi32>
    %12 = arith.extui %11 : vector<8x256xi1> to vector<8x256xi32>
    %13 = arith.sitofp %12 : vector<8x256xi32> to vector<8x256xf32>
    %14 = arith.addf %8, %13 : vector<8x256xf32>
    %15 = vector.extract_strided_slice %0 {offsets = [0, 2], sizes = [8, 1], strides = [1, 1]} : vector<8x4xi32> to vector<8x1xi32>
    %16 = vector.broadcast %15 : vector<8x1xi32> to vector<8x256xi32>
    %17 = arith.cmpi eq, %1, %16 : vector<8x256xi32>
    %18 = arith.extui %17 : vector<8x256xi1> to vector<8x256xi32>
    %19 = arith.sitofp %18 : vector<8x256xi32> to vector<8x256xf32>
    %20 = arith.addf %14, %19 : vector<8x256xf32>
    %21 = vector.extract_strided_slice %0 {offsets = [0, 3], sizes = [8, 1], strides = [1, 1]} : vector<8x4xi32> to vector<8x1xi32>
    %22 = vector.broadcast %21 : vector<8x1xi32> to vector<8x256xi32>
    %23 = arith.cmpi eq, %1, %22 : vector<8x256xi32>
    %24 = arith.extui %23 : vector<8x256xi1> to vector<8x256xi32>
    %25 = arith.sitofp %24 : vector<8x256xi32> to vector<8x256xf32>
    %26 = arith.addf %20, %25 : vector<8x256xf32>
    %c0_1 = arith.constant 0 : index
    %c0_2 = arith.constant 0 : index
    %27 = vector.load %arg2[%c0_1, %c0_2] : memref<256x128xf32, #tpu.memory_space<vmem>>, vector<256x128xf32>
    %cst_3 = arith.constant dense<0.000000e+00> : vector<8x128xf32>
    %28 = tpu.matmul %26, %27, %cst_3 {dimension_numbers = #tpu.dot_dimension_numbers<[1], [0], [0], [1], [0, 0, 1, 1], [], []>, precision = #tpu.contract_precision<fp32>} : vector<8x256xf32>, vector<256x128xf32>, vector<8x128xf32> -> vector<8x128xf32>
    %c0_4 = arith.constant 0 : index
    %c0_5 = arith.constant 0 : index
    %29 = vector.load %arg3[%c0_4, %c0_5] : memref<8x128xf32, #tpu.memory_space<vmem>>, vector<8x128xf32>
    tpu.vector_store %arg3[%c0_4, %c0_5], %28 {strides = array<i32>} : memref<8x128xf32, #tpu.memory_space<vmem>>, vector<8x128xf32>,
    return
  }
  func.func @transform_0(%arg0: i32) -> (i32, i32) {
    %c0_i32 = arith.constant 0 : i32
    %c0_i32_0 = arith.constant 0 : i32
    return %arg0, %c0_i32 : i32, i32
  }
  func.func @transform_1(%arg0: i32) -> (i32, i32) {
    %c0_i32 = arith.constant 0 : i32
    %c0_i32_0 = arith.constant 0 : i32
    %c0_i32_1 = arith.constant 0 : i32
    return %c0_i32, %c0_i32_0 : i32, i32
  }
  func.func @transform_2(%arg0: i32) -> (i32, i32) {
    %c0_i32 = arith.constant 0 : i32
    %c0_i32_0 = arith.constant 0 : i32
    return %arg0, %c0_i32 : i32, i32
  }
}

</mosaic_0001>

<llo_original>
// kernel: tpu_custom_call.1
$region0: #{tpu_custom_call.1}
  #allocation0 [shape = 'u32[]', space=smem, size = 0x4, offset = 0x4, fixed_abs, tag = 'smem constant byte address 0x4 - core index']
  #allocation1 [shape = 'u32[72,128]{1,0:T(1,128)}', space=vmem, size = 0x9000, scoped, tag = 'internal scratch']
  %s0 = inlined_call_operand.vmem [shape: s32[8,4], index: 0, kind: input, shape index: {}]
  %s1 = inlined_call_operand.hbm [shape: f32[256,128], index: 1, kind: input, shape index: {}]
  %s2 = inlined_call_operand.hbm [shape: f32[8,128], index: 2, kind: output, shape index: {}]
  %s3 = sld [smem:[#allocation0]]
  $region22: #{tpu_custom_call.1} parent=0
    _
  %s5 = ssub.s32 1, %s3
  %s6 = scalar_select 0, %s5, %s3
  $region1: #{tpu_custom_call.1} parent=0
    #allocation2 [shape = 'u8[131072]{0}', space=vmem, size = 0x20000, scoped, tag = 'input window, operand 1, single buffered']
    #allocation3 [shape = 's32[1]{0}', space=sflag, size = 0x4, scoped, tag = 'scoped memory for tpu_custom_call.1']
    #allocation4 [shape = 's32[1]{0}', space=sflag, size = 0x4, scoped, tag = 'scoped memory for tpu_custom_call.1']
    #allocation5 [shape = 'u8[4096]{0}', space=vmem, size = 0x1000, scoped, tag = 'output window, operand 0, single buffered']
    %7 = vsyncpa [#allocation3], 0
    %8 = vsyncpa [#allocation4], 0
    // Predicated region
    $region2: #{tpu_custom_call.1} parent=1 // pred_check
      _
    $region3: #{tpu_custom_call.1} parent=1 // pred_check_branch
      %10 = sbr.rel (0) target = $region5
    $region4: #{tpu_custom_call.1} parent=1 // pred_region
      _
    $region5: #{tpu_custom_call.1} parent=1 // pred_fallthru
      _
    // Predicated region
    $region6: #{tpu_custom_call.1} parent=1 // pred_check
      _
    $region7: #{tpu_custom_call.1} parent=1 // pred_check_branch
      %12 = sbr.rel (0) target = $region9
    $region8: #{tpu_custom_call.1} parent=1 // pred_region
      %14 = vsyncadd [#allocation3], 0
      %s15 = sshll.u32 %s1, 4
      %s16 = int_to_ptr.hbm [resolvable:$true] %s15
      %s17 = sshll.u32 [#allocation2], 4
      %s18 = int_to_ptr.vmem [resolvable:$true] %s17
      %23 = dma.hbm_to_vmem [thread:$0]  %s16, 4096, %s18, [#allocation3], 128, 128, 8
    $region9: #{tpu_custom_call.1} parent=1 // pred_fallthru
      _
    // Predicated region
    $region10: #{tpu_custom_call.1} parent=1 // pred_check
      _
    $region11: #{tpu_custom_call.1} parent=1 // pred_check_branch
      %25 = sbr.rel (0) target = $region13
    $region12: #{tpu_custom_call.1} parent=1 // pred_region
      %27 = dma.done [#allocation3], 4096
    $region13: #{tpu_custom_call.1} parent=1 // pred_fallthru
      _
    %v28 = vld [vmem:[%s0] sm:$0xff]
    %v29 = vlaneseq
    %v30 = vand.u32 %v29, 127
    %v31 = vadd.s32 %v30, 128
    %32 = vset.pattern.permute.xlu0 0
    %33 = vperm.xlu0 %32, %v28
    %v34 = vpop.permute.xlu0 %33
    %vm35 = vcmp.eq.s32.totalorder %v30, %v34
    %vm36 = vcmp.eq.s32.totalorder %v31, %v34
    %v37 = vsel %vm35, 1, 0
    %v38 = vsel %vm36, 1, 0
    %v39 = vcvt.s32.f32 %v37
    %v40 = vcvt.s32.f32 %v38
    %v41 = vadd.f32 %v39, 0.0
    %v42 = vadd.f32 %v40, 0.0
    %43 = vset.pattern.permute.xlu0 1
    %44 = vperm.xlu0 %43, %v28
    %v45 = vpop.permute.xlu0 %44
    %vm46 = vcmp.eq.s32.totalorder %v30, %v45
    %vm47 = vcmp.eq.s32.totalorder %v31, %v45
    %v48 = vsel %vm46, 1, 0
    %v49 = vsel %vm47, 1, 0
    %v50 = vcvt.s32.f32 %v48
    %v51 = vcvt.s32.f32 %v49
    %v52 = vadd.f32 %v41, %v50
    %v53 = vadd.f32 %v42, %v51
    %54 = vset.pattern.permute.xlu0 2
    %55 = vperm.xlu0 %54, %v28
    %v56 = vpop.permute.xlu0 %55
    %vm57 = vcmp.eq.s32.totalorder %v30, %v56
    %vm58 = vcmp.eq.s32.totalorder %v31, %v56
    %v59 = vsel %vm57, 1, 0
    %v60 = vsel %vm58, 1, 0
    %v61 = vcvt.s32.f32 %v59
    %v62 = vcvt.s32.f32 %v60
    %v63 = vadd.f32 %v52, %v61
    %v64 = vadd.f32 %v53, %v62
    %65 = vset.pattern.permute.xlu0 3
    %66 = vperm.xlu0 %65, %v28
    %v67 = vpop.permute.xlu0 %66
    %vm68 = vcmp.eq.s32.totalorder %v30, %v67
    %vm69 = vcmp.eq.s32.totalorder %v31, %v67
    %v70 = vsel %vm68, 1, 0
    %v71 = vsel %vm69, 1, 0
    %v72 = vcvt.s32.f32 %v70
    %v73 = vcvt.s32.f32 %v71
    %v74 = vadd.f32 %v63, %v72
    %v75 = vadd.f32 %v64, %v73
    %v76 = vld [vmem:[#allocation2] sm:$0xff]
    %v77 = vld [vmem:[#allocation2 + $0x8] sm:$0xff]
    %v78 = vld [vmem:[#allocation2 + $0x10] sm:$0xff]
    %v79 = vld [vmem:[#allocation2 + $0x18] sm:$0xff]
    %v80 = vld [vmem:[#allocation2 + $0x20] sm:$0xff]
    %v81 = vld [vmem:[#allocation2 + $0x28] sm:$0xff]
    %v82 = vld [vmem:[#allocation2 + $0x30] sm:$0xff]
    %v83 = vld [vmem:[#allocation2 + $0x38] sm:$0xff]
    %v84 = vld [vmem:[#allocation2 + $0x40] sm:$0xff]
    %v85 = vld [vmem:[#allocation2 + $0x48] sm:$0xff]
    %v86 = vld [vmem:[#allocation2 + $0x50] sm:$0xff]
    %v87 = vld [vmem:[#allocation2 + $0x58] sm:$0xff]
    %v88 = vld [vmem:[#allocation2 + $0x60] sm:$0xff]
    %v89 = vld [vmem:[#allocation2 + $0x68] sm:$0xff]
    %v90 = vld [vmem:[#allocation2 + $0x70] sm:$0xff]
    %v91 = vld [vmem:[#allocation2 + $0x78] sm:$0xff]
    %v92 = vld [vmem:[#allocation2 + $0x80] sm:$0xff]
    %v93 = vld [vmem:[#allocation2 + $0x88] sm:$0xff]
    %v94 = vld [vmem:[#allocation2 + $0x90] sm:$0xff]
    %v95 = vld [vmem:[#allocation2 + $0x98] sm:$0xff]
    %v96 = vld [vmem:[#allocation2 + $0xa0] sm:$0xff]
    %v97 = vld [vmem:[#allocation2 + $0xa8] sm:$0xff]
    %v98 = vld [vmem:[#allocation2 + $0xb0] sm:$0xff]
    %v99 = vld [vmem:[#allocation2 + $0xb8] sm:$0xff]
    %v100 = vld [vmem:[#allocation2 + $0xc0] sm:$0xff]
    %v101 = vld [vmem:[#allocation2 + $0xc8] sm:$0xff]
    %v102 = vld [vmem:[#allocation2 + $0xd0] sm:$0xff]
    %v103 = vld [vmem:[#allocation2 + $0xd8] sm:$0xff]
    %v104 = vld [vmem:[#allocation2 + $0xe0] sm:$0xff]
    %v105 = vld [vmem:[#allocation2 + $0xe8] sm:$0xff]
    %v106 = vld [vmem:[#allocation2 + $0xf0] sm:$0xff]
    %v107 = vld [vmem:[#allocation2 + $0xf8] sm:$0xff]
    %v108 = vand.u32 %v91, 4294901760
    %109 = vmatpush.msra.mxu0 %v108
    %v110 = vand.u32 %v90, 4294901760
    %111 = vmatpush.msra.mxu0 %v110
    %v112 = vand.u32 %v89, 4294901760
    %113 = vmatpush.msra.mxu0 %v112
    %v114 = vand.u32 %v88, 4294901760
    %115 = vmatpush.msra.mxu0 %v114
    %v116 = vand.u32 %v87, 4294901760
    %117 = vmatpush.msra.mxu0 %v116
    %v118 = vand.u32 %v86, 4294901760
    %119 = vmatpush.msra.mxu0 %v118
    %v120 = vand.u32 %v85, 4294901760
    %121 = vmatpush.msra.mxu0 %v120
    %v122 = vand.u32 %v84, 4294901760
    %123 = vmatpush.msra.mxu0 %v122
    %v124 = vand.u32 %v83, 4294901760
    %125 = vmatpush.msra.mxu0 %v124
    %v126 = vand.u32 %v82, 4294901760
    %127 = vmatpush.msra.mxu0 %v126
    %v128 = vand.u32 %v81, 4294901760
    %129 = vmatpush.msra.mxu0 %v128
    %v130 = vand.u32 %v80, 4294901760
    %131 = vmatpush.msra.mxu0 %v130
    %v132 = vand.u32 %v79, 4294901760
    %133 = vmatpush.msra.mxu0 %v132
    %v134 = vand.u32 %v78, 4294901760
    %135 = vmatpush.msra.mxu0 %v134
    %v136 = vand.u32 %v77, 4294901760
    %137 = vmatpush.msra.mxu0 %v136
    %v138 = vand.u32 %v76, 4294901760
    %139 = vmatpush.msra.mxu0 %v138
    %v140 = vand.u32 %v74, 4294901760
    %v141 = vsub.f32 %v74, %v140
    %v142 = vand.u32 %v141, 4294901760
    %v143 = vsub.f32 %v141, %v142
    %v144 = vand.u32 %v143, 4294901760
    %145 = vmatmul.f32.gmra.mxu0 %v144
    %v146 = vpop.f32.mrf.mxu0
    %v147 = vadd.f32 0.0, %v146
    %148 = vdwg.mxu0
    %v149 = vand.u32 %v91, 4294901760
    %v150 = vsub.f32 %v91, %v149
    %v151 = vand.u32 %v150, 4294901760
    %v152 = vsub.f32 %v150, %v151
    %v153 = vand.u32 %v152, 4294901760
    %154 = vmatpush.msra.mxu0 %v153
    %v155 = vand.u32 %v90, 4294901760
    %v156 = vsub.f32 %v90, %v155
    %v157 = vand.u32 %v156, 4294901760
    %v158 = vsub.f32 %v156, %v157
    %v159 = vand.u32 %v158, 4294901760
    %160 = vmatpush.msra.mxu0 %v159
    %v161 = vand.u32 %v89, 4294901760
    %v162 = vsub.f32 %v89, %v161
    %v163 = vand.u32 %v162, 4294901760
    %v164 = vsub.f32 %v162, %v163
    %v165 = vand.u32 %v164, 4294901760
    %166 = vmatpush.msra.mxu0 %v165
    %v167 = vand.u32 %v88, 4294901760
    %v168 = vsub.f32 %v88, %v167
    %v169 = vand.u32 %v168, 4294901760
    %v170 = vsub.f32 %v168, %v169
    %v171 = vand.u32 %v170, 4294901760
    %172 = vmatpush.msra.mxu0 %v171
    %v173 = vand.u32 %v87, 4294901760
    %v174 = vsub.f32 %v87, %v173
    %v175 = vand.u32 %v174, 4294901760
    %v176 = vsub.f32 %v174, %v175
    %v177 = vand.u32 %v176, 4294901760
    %178 = vmatpush.msra.mxu0 %v177
    %v179 = vand.u32 %v86, 4294901760
    %v180 = vsub.f32 %v86, %v179
    %v181 = vand.u32 %v180, 4294901760
    %v182 = vsub.f32 %v180, %v181
    %v183 = vand.u32 %v182, 4294901760
    %184 = vmatpush.msra.mxu0 %v183
    %v185 = vand.u32 %v85, 4294901760
    %v186 = vsub.f32 %v85, %v185
    %v187 = vand.u32 %v186, 4294901760
    %v188 = vsub.f32 %v186, %v187
    %v189 = vand.u32 %v188, 4294901760
    %190 = vmatpush.msra.mxu0 %v189
    %v191 = vand.u32 %v84, 4294901760
    %v192 = vsub.f32 %v84, %v191
    %v193 = vand.u32 %v192, 4294901760
    %v194 = vsub.f32 %v192, %v193
    %v195 = vand.u32 %v194, 4294901760
    %196 = vmatpush.msra.mxu0 %v195
    %v197 = vand.u32 %v83, 4294901760
    %v198 = vsub.f32 %v83, %v197
    %v199 = vand.u32 %v198, 4294901760
    %v200 = vsub.f32 %v198, %v199
    %v201 = vand.u32 %v200, 4294901760
    %202 = vmatpush.msra.mxu0 %v201
    %v203 = vand.u32 %v82, 4294901760
    %v204 = vsub.f32 %v82, %v203
    %v205 = vand.u32 %v204, 4294901760
    %v206 = vsub.f32 %v204, %v205
    %v207 = vand.u32 %v206, 4294901760
    %208 = vmatpush.msra.mxu0 %v207
    %v209 = vand.u32 %v81, 4294901760
    %v210 = vsub.f32 %v81, %v209
    %v211 = vand.u32 %v210, 4294901760
    %v212 = vsub.f32 %v210, %v211
    %v213 = vand.u32 %v212, 4294901760
    %214 = vmatpush.msra.mxu0 %v213
    %v215 = vand.u32 %v80, 4294901760
    %v216 = vsub.f32 %v80, %v215
    %v217 = vand.u32 %v216, 4294901760
    %v218 = vsub.f32 %v216, %v217
    %v219 = vand.u32 %v218, 4294901760
    %220 = vmatpush.msra.mxu0 %v219
    %v221 = vand.u32 %v79, 4294901760
    %v222 = vsub.f32 %v79, %v221
    %v223 = vand.u32 %v222, 4294901760
    %v224 = vsub.f32 %v222, %v223
    %v225 = vand.u32 %v224, 4294901760
    %226 = vmatpush.msra.mxu0 %v225
    %v227 = vand.u32 %v78, 4294901760
    %v228 = vsub.f32 %v78, %v227
    %v229 = vand.u32 %v228, 4294901760
    %v230 = vsub.f32 %v228, %v229
    %v231 = vand.u32 %v230, 4294901760
    %232 = vmatpush.msra.mxu0 %v231
    %v233 = vand.u32 %v77, 4294901760
    %v234 = vsub.f32 %v77, %v233
    %v235 = vand.u32 %v234, 4294901760
    %v236 = vsub.f32 %v234, %v235
    %v237 = vand.u32 %v236, 4294901760
    %238 = vmatpush.msra.mxu0 %v237
    %v239 = vand.u32 %v76, 4294901760
    %v240 = vsub.f32 %v76, %v239
    %v241 = vand.u32 %v240, 4294901760
    %v242 = vsub.f32 %v240, %v241
    %v243 = vand.u32 %v242, 4294901760
    %244 = vmatpush.msra.mxu0 %v243
    %v245 = vand.u32 %v74, 4294901760
    %246 = vmatmul.f32.gmra.mxu0 %v245
    %v247 = vpop.f32.mrf.mxu0
    %v248 = vadd.f32 %v147, %v247
    %249 = vdwg.mxu0
    %v250 = vand.u32 %v91, 4294901760
    %v251 = vsub.f32 %v91, %v250
    %252 = vmatpush.msra.mxu0 %v251
    %v253 = vand.u32 %v90, 4294901760
    %v254 = vsub.f32 %v90, %v253
    %255 = vmatpush.msra.mxu0 %v254
    %v256 = vand.u32 %v89, 4294901760
    %v257 = vsub.f32 %v89, %v256
    %258 = vmatpush.msra.mxu0 %v257
    %v259 = vand.u32 %v88, 4294901760
    %v260 = vsub.f32 %v88, %v259
    %261 = vmatpush.msra.mxu0 %v260
    %v262 = vand.u32 %v87, 4294901760
    %v263 = vsub.f32 %v87, %v262
    %264 = vmatpush.msra.mxu0 %v263
    %v265 = vand.u32 %v86, 4294901760
    %v266 = vsub.f32 %v86, %v265
    %267 = vmatpush.msra.mxu0 %v266
    %v268 = vand.u32 %v85, 4294901760
    %v269 = vsub.f32 %v85, %v268
    %270 = vmatpush.msra.mxu0 %v269
    %v271 = vand.u32 %v84, 4294901760
    %v272 = vsub.f32 %v84, %v271
    %273 = vmatpush.msra.mxu0 %v272
    %v274 = vand.u32 %v83, 4294901760
    %v275 = vsub.f32 %v83, %v274
    %276 = vmatpush.msra.mxu0 %v275
    %v277 = vand.u32 %v82, 4294901760
    %v278 = vsub.f32 %v82, %v277
    %279 = vmatpush.msra.mxu0 %v278
    %v280 = vand.u32 %v81, 4294901760
    %v281 = vsub.f32 %v81, %v280
    %282 = vmatpush.msra.mxu0 %v281
    %v283 = vand.u32 %v80, 4294901760
    %v284 = vsub.f32 %v80, %v283
    %285 = vmatpush.msra.mxu0 %v284
    %v286 = vand.u32 %v79, 4294901760
    %v287 = vsub.f32 %v79, %v286
    %288 = vmatpush.msra.mxu0 %v287
    %v289 = vand.u32 %v78, 4294901760
    %v290 = vsub.f32 %v78, %v289
    %291 = vmatpush.msra.mxu0 %v290
    %v292 = vand.u32 %v77, 4294901760
    %v293 = vsub.f32 %v77, %v292
    %294 = vmatpush.msra.mxu0 %v293
    %v295 = vand.u32 %v76, 4294901760
    %v296 = vsub.f32 %v76, %v295
    %297 = vmatpush.msra.mxu0 %v296
    %v298 = vand.u32 %v74, 4294901760
    %v299 = vsub.f32 %v74, %v298
    %300 = vmatmul.f32.gmra.mxu0 %v299
    %v301 = vpop.f32.mrf.mxu0
    %v302 = vadd.f32 %v248, %v301
    %303 = vdwg.mxu0
    %v304 = vand.u32 %v91, 4294901760
    %305 = vmatpush.msra.mxu0 %v304
    %v306 = vand.u32 %v90, 4294901760
    %307 = vmatpush.msra.mxu0 %v306
    %v308 = vand.u32 %v89, 4294901760
    %309 = vmatpush.msra.mxu0 %v308
    %v310 = vand.u32 %v88, 4294901760
    %311 = vmatpush.msra.mxu0 %v310
    %v312 = vand.u32 %v87, 4294901760
    %313 = vmatpush.msra.mxu0 %v312
    %v314 = vand.u32 %v86, 4294901760
    %315 = vmatpush.msra.mxu0 %v314
    %v316 = vand.u32 %v85, 4294901760
    %317 = vmatpush.msra.mxu0 %v316
    %v318 = vand.u32 %v84, 4294901760
    %319 = vmatpush.msra.mxu0 %v318
    %v320 = vand.u32 %v83, 4294901760
    %321 = vmatpush.msra.mxu0 %v320
    %v322 = vand.u32 %v82, 4294901760
    %323 = vmatpush.msra.mxu0 %v322
    %v324 = vand.u32 %v81, 4294901760
    %325 = vmatpush.msra.mxu0 %v324
    %v326 = vand.u32 %v80, 4294901760
    %327 = vmatpush.msra.mxu0 %v326
    %v328 = vand.u32 %v79, 4294901760
    %329 = vmatpush.msra.mxu0 %v328
    %v330 = vand.u32 %v78, 4294901760
    %331 = vmatpush.msra.mxu0 %v330
    %v332 = vand.u32 %v77, 4294901760
    %333 = vmatpush.msra.mxu0 %v332
    %v334 = vand.u32 %v76, 4294901760
    %335 = vmatpush.msra.mxu0 %v334
    %v336 = vand.u32 %v74, 4294901760
    %v337 = vsub.f32 %v74, %v336
    %v338 = vand.u32 %v337, 4294901760
    %339 = vmatmul.f32.gmra.mxu0 %v338
    %v340 = vpop.f32.mrf.mxu0
    %v341 = vadd.f32 %v302, %v340
    %342 = vdwg.mxu0
    %v343 = vand.u32 %v91, 4294901760
    %v344 = vsub.f32 %v91, %v343
    %v345 = vand.u32 %v344, 4294901760
    %346 = vmatpush.msra.mxu0 %v345
    %v347 = vand.u32 %v90, 4294901760
    %v348 = vsub.f32 %v90, %v347
    %v349 = vand.u32 %v348, 4294901760
    %350 = vmatpush.msra.mxu0 %v349
    %v351 = vand.u32 %v89, 4294901760
    %v352 = vsub.f32 %v89, %v351
    %v353 = vand.u32 %v352, 4294901760
    %354 = vmatpush.msra.mxu0 %v353
    %v355 = vand.u32 %v88, 4294901760
    %v356 = vsub.f32 %v88, %v355
    %v357 = vand.u32 %v356, 4294901760
    %358 = vmatpush.msra.mxu0 %v357
    %v359 = vand.u32 %v87, 4294901760
    %v360 = vsub.f32 %v87, %v359
    %v361 = vand.u32 %v360, 4294901760
    %362 = vmatpush.msra.mxu0 %v361
    %v363 = vand.u32 %v86, 4294901760
    %v364 = vsub.f32 %v86, %v363
    %v365 = vand.u32 %v364, 4294901760
    %366 = vmatpush.msra.mxu0 %v365
    %v367 = vand.u32 %v85, 4294901760
    %v368 = vsub.f32 %v85, %v367
    %v369 = vand.u32 %v368, 4294901760
    %370 = vmatpush.msra.mxu0 %v369
    %v371 = vand.u32 %v84, 4294901760
    %v372 = vsub.f32 %v84, %v371
    %v373 = vand.u32 %v372, 4294901760
    %374 = vmatpush.msra.mxu0 %v373
    %v375 = vand.u32 %v83, 4294901760
    %v376 = vsub.f32 %v83, %v375
    %v377 = vand.u32 %v376, 4294901760
    %378 = vmatpush.msra.mxu0 %v377
    %v379 = vand.u32 %v82, 4294901760
    %v380 = vsub.f32 %v82, %v379
    %v381 = vand.u32 %v380, 4294901760
    %382 = vmatpush.msra.mxu0 %v381
    %v383 = vand.u32 %v81, 4294901760
    %v384 = vsub.f32 %v81, %v383
    %v385 = vand.u32 %v384, 4294901760
    %386 = vmatpush.msra.mxu0 %v385
    %v387 = vand.u32 %v80, 4294901760
    %v388 = vsub.f32 %v80, %v387
    %v389 = vand.u32 %v388, 4294901760
    %390 = vmatpush.msra.mxu0 %v389
    %v391 = vand.u32 %v79, 4294901760
    %v392 = vsub.f32 %v79, %v391
    %v393 = vand.u32 %v392, 4294901760
    %394 = vmatpush.msra.mxu0 %v393
    %v395 = vand.u32 %v78, 4294901760
    %v396 = vsub.f32 %v78, %v395
    %v397 = vand.u32 %v396, 4294901760
    %398 = vmatpush.msra.mxu0 %v397
    %v399 = vand.u32 %v77, 4294901760
    %v400 = vsub.f32 %v77, %v399
    %v401 = vand.u32 %v400, 4294901760
    %402 = vmatpush.msra.mxu0 %v401
    %v403 = vand.u32 %v76, 4294901760
    %v404 = vsub.f32 %v76, %v403
    %v405 = vand.u32 %v404, 4294901760
    %406 = vmatpush.msra.mxu0 %v405
    %v407 = vand.u32 %v74, 4294901760
    %408 = vmatmul.f32.gmra.mxu0 %v407
    %v409 = vpop.f32.mrf.mxu0
    %v410 = vadd.f32 %v341, %v409
    %411 = vdwg.mxu0
    %v412 = vand.u32 %v91, 4294901760
    %413 = vmatpush.msra.mxu0 %v412
    %v414 = vand.u32 %v90, 4294901760
    %415 = vmatpush.msra.mxu0 %v414
    %v416 = vand.u32 %v89, 4294901760
    %417 = vmatpush.msra.mxu0 %v416
    %v418 = vand.u32 %v88, 4294901760
    %419 = vmatpush.msra.mxu0 %v418
    %v420 = vand.u32 %v87, 4294901760
    %421 = vmatpush.msra.mxu0 %v420
    %v422 = vand.u32 %v86, 4294901760
    %423 = vmatpush.msra.mxu0 %v422
    %v424 = vand.u32 %v85, 4294901760
    %425 = vmatpush.msra.mxu0 %v424
    %v426 = vand.u32 %v84, 4294901760
    %427 = vmatpush.msra.mxu0 %v426
    %v428 = vand.u32 %v83, 4294901760
    %429 = vmatpush.msra.mxu0 %v428
    %v430 = vand.u32 %v82, 4294901760
    %431 = vmatpush.msra.mxu0 %v430
    %v432 = vand.u32 %v81, 4294901760
    %433 = vmatpush.msra.mxu0 %v432
    %v434 = vand.u32 %v80, 4294901760
    %435 = vmatpush.msra.mxu0 %v434
    %v436 = vand.u32 %v79, 4294901760
    %437 = vmatpush.msra.mxu0 %v436
    %v438 = vand.u32 %v78, 4294901760
    %439 = vmatpush.msra.mxu0 %v438
    %v440 = vand.u32 %v77, 4294901760
    %441 = vmatpush.msra.mxu0 %v440
    %v442 = vand.u32 %v76, 4294901760
    %443 = vmatpush.msra.mxu0 %v442
    %v444 = vand.u32 %v74, 4294901760
    %445 = vmatmul.f32.gmra.mxu0 %v444
    %v446 = vpop.f32.mrf.mxu0
    %v447 = vadd.f32 %v410, %v446
    %448 = vdwg.mxu0
    %v449 = vand.u32 %v107, 4294901760
    %450 = vmatpush.msra.mxu0 %v449
    %v451 = vand.u32 %v106, 4294901760
    %452 = vmatpush.msra.mxu0 %v451
    %v453 = vand.u32 %v105, 4294901760
    %454 = vmatpush.msra.mxu0 %v453
    %v455 = vand.u32 %v104, 4294901760
    %456 = vmatpush.msra.mxu0 %v455
    %v457 = vand.u32 %v103, 4294901760
    %458 = vmatpush.msra.mxu0 %v457
    %v459 = vand.u32 %v102, 4294901760
    %460 = vmatpush.msra.mxu0 %v459
    %v461 = vand.u32 %v101, 4294901760
    %462 = vmatpush.msra.mxu0 %v461
    %v463 = vand.u32 %v100, 4294901760
    %464 = vmatpush.msra.mxu0 %v463
    %v465 = vand.u32 %v99, 4294901760
    %466 = vmatpush.msra.mxu0 %v465
    %v467 = vand.u32 %v98, 4294901760
    %468 = vmatpush.msra.mxu0 %v467
    %v469 = vand.u32 %v97, 4294901760
    %470 = vmatpush.msra.mxu0 %v469
    %v471 = vand.u32 %v96, 4294901760
    %472 = vmatpush.msra.mxu0 %v471
    %v473 = vand.u32 %v95, 4294901760
    %474 = vmatpush.msra.mxu0 %v473
    %v475 = vand.u32 %v94, 4294901760
    %476 = vmatpush.msra.mxu0 %v475
    %v477 = vand.u32 %v93, 4294901760
    %478 = vmatpush.msra.mxu0 %v477
    %v479 = vand.u32 %v92, 4294901760
    %480 = vmatpush.msra.mxu0 %v479
    %v481 = vand.u32 %v75, 4294901760
    %v482 = vsub.f32 %v75, %v481
    %v483 = vand.u32 %v482, 4294901760
    %v484 = vsub.f32 %v482, %v483
    %v485 = vand.u32 %v484, 4294901760
    %486 = vmatmul.f32.gmra.mxu0 %v485
    %v487 = vpop.f32.mrf.mxu0
    %v488 = vadd.f32 %v447, %v487
    %489 = vdwg.mxu0
    %v490 = vand.u32 %v107, 4294901760
    %v491 = vsub.f32 %v107, %v490
    %v492 = vand.u32 %v491, 4294901760
    %v493 = vsub.f32 %v491, %v492
    %v494 = vand.u32 %v493, 4294901760
    %495 = vmatpush.msra.mxu0 %v494
    %v496 = vand.u32 %v106, 4294901760
    %v497 = vsub.f32 %v106, %v496
    %v498 = vand.u32 %v497, 4294901760
    %v499 = vsub.f32 %v497, %v498
    %v500 = vand.u32 %v499, 4294901760
    %501 = vmatpush.msra.mxu0 %v500
    %v502 = vand.u32 %v105, 4294901760
    %v503 = vsub.f32 %v105, %v502
    %v504 = vand.u32 %v503, 4294901760
    %v505 = vsub.f32 %v503, %v504
    %v506 = vand.u32 %v505, 4294901760
    %507 = vmatpush.msra.mxu0 %v506
    %v508 = vand.u32 %v104, 4294901760
    %v509 = vsub.f32 %v104, %v508
    %v510 = vand.u32 %v509, 4294901760
    %v511 = vsub.f32 %v509, %v510
    %v512 = vand.u32 %v511, 4294901760
    %513 = vmatpush.msra.mxu0 %v512
    %v514 = vand.u32 %v103, 4294901760
    %v515 = vsub.f32 %v103, %v514
    %v516 = vand.u32 %v515, 4294901760
    %v517 = vsub.f32 %v515, %v516
    %v518 = vand.u32 %v517, 4294901760
    %519 = vmatpush.msra.mxu0 %v518
    %v520 = vand.u32 %v102, 4294901760
    %v521 = vsub.f32 %v102, %v520
    %v522 = vand.u32 %v521, 4294901760
    %v523 = vsub.f32 %v521, %v522
    %v524 = vand.u32 %v523, 4294901760
    %525 = vmatpush.msra.mxu0 %v524
    %v526 = vand.u32 %v101, 4294901760
    %v527 = vsub.f32 %v101, %v526
    %v528 = vand.u32 %v527, 4294901760
    %v529 = vsub.f32 %v527, %v528
    %v530 = vand.u32 %v529, 4294901760
    %531 = vmatpush.msra.mxu0 %v530
    %v532 = vand.u32 %v100, 4294901760
    %v533 = vsub.f32 %v100, %v532
    %v534 = vand.u32 %v533, 4294901760
    %v535 = vsub.f32 %v533, %v534
    %v536 = vand.u32 %v535, 4294901760
    %537 = vmatpush.msra.mxu0 %v536
    %v538 = vand.u32 %v99, 4294901760
    %v539 = vsub.f32 %v99, %v538
    %v540 = vand.u32 %v539, 4294901760
    %v541 = vsub.f32 %v539, %v540
    %v542 = vand.u32 %v541, 4294901760
    %543 = vmatpush.msra.mxu0 %v542
    %v544 = vand.u32 %v98, 4294901760
    %v545 = vsub.f32 %v98, %v544
    %v546 = vand.u32 %v545, 4294901760
    %v547 = vsub.f32 %v545, %v546
    %v548 = vand.u32 %v547, 4294901760
    %549 = vmatpush.msra.mxu0 %v548
    %v550 = vand.u32 %v97, 4294901760
    %v551 = vsub.f32 %v97, %v550
    %v552 = vand.u32 %v551, 4294901760
    %v553 = vsub.f32 %v551, %v552
    %v554 = vand.u32 %v553, 4294901760
    %555 = vmatpush.msra.mxu0 %v554
    %v556 = vand.u32 %v96, 4294901760
    %v557 = vsub.f32 %v96, %v556
    %v558 = vand.u32 %v557, 4294901760
    %v559 = vsub.f32 %v557, %v558
    %v560 = vand.u32 %v559, 4294901760
    %561 = vmatpush.msra.mxu0 %v560
    %v562 = vand.u32 %v95, 4294901760
    %v563 = vsub.f32 %v95, %v562
    %v564 = vand.u32 %v563, 4294901760
    %v565 = vsub.f32 %v563, %v564
    %v566 = vand.u32 %v565, 4294901760
    %567 = vmatpush.msra.mxu0 %v566
    %v568 = vand.u32 %v94, 4294901760
    %v569 = vsub.f32 %v94, %v568
    %v570 = vand.u32 %v569, 4294901760
    %v571 = vsub.f32 %v569, %v570
    %v572 = vand.u32 %v571, 4294901760
    %573 = vmatpush.msra.mxu0 %v572
    %v574 = vand.u32 %v93, 4294901760
    %v575 = vsub.f32 %v93, %v574
    %v576 = vand.u32 %v575, 4294901760
    %v577 = vsub.f32 %v575, %v576
    %v578 = vand.u32 %v577, 4294901760
    %579 = vmatpush.msra.mxu0 %v578
    %v580 = vand.u32 %v92, 4294901760
    %v581 = vsub.f32 %v92, %v580
    %v582 = vand.u32 %v581, 4294901760
    %v583 = vsub.f32 %v581, %v582
    %v584 = vand.u32 %v583, 4294901760
    %585 = vmatpush.msra.mxu0 %v584
    %v586 = vand.u32 %v75, 4294901760
    %587 = vmatmul.f32.gmra.mxu0 %v586
    %v588 = vpop.f32.mrf.mxu0
    %v589 = vadd.f32 %v488, %v588
    %590 = vdwg.mxu0
    %v591 = vand.u32 %v107, 4294901760
    %v592 = vsub.f32 %v107, %v591
    %593 = vmatpush.msra.mxu0 %v592
    %v594 = vand.u32 %v106, 4294901760
    %v595 = vsub.f32 %v106, %v594
    %596 = vmatpush.msra.mxu0 %v595
    %v597 = vand.u32 %v105, 4294901760
    %v598 = vsub.f32 %v105, %v597
    %599 = vmatpush.msra.mxu0 %v598
    %v600 = vand.u32 %v104, 4294901760
    %v601 = vsub.f32 %v104, %v600
    %602 = vmatpush.msra.mxu0 %v601
    %v603 = vand.u32 %v103, 4294901760
    %v604 = vsub.f32 %v103, %v603
    %605 = vmatpush.msra.mxu0 %v604
    %v606 = vand.u32 %v102, 4294901760
    %v607 = vsub.f32 %v102, %v606
    %608 = vmatpush.msra.mxu0 %v607
    %v609 = vand.u32 %v101, 4294901760
    %v610 = vsub.f32 %v101, %v609
    %611 = vmatpush.msra.mxu0 %v610
    %v612 = vand.u32 %v100, 4294901760
    %v613 = vsub.f32 %v100, %v612
    %614 = vmatpush.msra.mxu0 %v613
    %v615 = vand.u32 %v99, 4294901760
    %v616 = vsub.f32 %v99, %v615
    %617 = vmatpush.msra.mxu0 %v616
    %v618 = vand.u32 %v98, 4294901760
    %v619 = vsub.f32 %v98, %v618
    %620 = vmatpush.msra.mxu0 %v619
    %v621 = vand.u32 %v97, 4294901760
    %v622 = vsub.f32 %v97, %v621
    %623 = vmatpush.msra.mxu0 %v622
    %v624 = vand.u32 %v96, 4294901760
    %v625 = vsub.f32 %v96, %v624
    %626 = vmatpush.msra.mxu0 %v625
    %v627 = vand.u32 %v95, 4294901760
    %v628 = vsub.f32 %v95, %v627
    %629 = vmatpush.msra.mxu0 %v628
    %v630 = vand.u32 %v94, 4294901760
    %v631 = vsub.f32 %v94, %v630
    %632 = vmatpush.msra.mxu0 %v631
    %v633 = vand.u32 %v93, 4294901760
    %v634 = vsub.f32 %v93, %v633
    %635 = vmatpush.msra.mxu0 %v634
    %v636 = vand.u32 %v92, 4294901760
    %v637 = vsub.f32 %v92, %v636
    %638 = vmatpush.msra.mxu0 %v637
    %v639 = vand.u32 %v75, 4294901760
    %v640 = vsub.f32 %v75, %v639
    %641 = vmatmul.f32.gmra.mxu0 %v640
    %v642 = vpop.f32.mrf.mxu0
    %v643 = vadd.f32 %v589, %v642
    %644 = vdwg.mxu0
    %v645 = vand.u32 %v107, 4294901760
    %646 = vmatpush.msra.mxu0 %v645
    %v647 = vand.u32 %v106, 4294901760
    %648 = vmatpush.msra.mxu0 %v647
    %v649 = vand.u32 %v105, 4294901760
    %650 = vmatpush.msra.mxu0 %v649
    %v651 = vand.u32 %v104, 4294901760
    %652 = vmatpush.msra.mxu0 %v651
    %v653 = vand.u32 %v103, 4294901760
    %654 = vmatpush.msra.mxu0 %v653
    %v655 = vand.u32 %v102, 4294901760
    %656 = vmatpush.msra.mxu0 %v655
    %v657 = vand.u32 %v101, 4294901760
    %658 = vmatpush.msra.mxu0 %v657
    %v659 = vand.u32 %v100, 4294901760
    %660 = vmatpush.msra.mxu0 %v659
    %v661 = vand.u32 %v99, 4294901760
    %662 = vmatpush.msra.mxu0 %v661
    %v663 = vand.u32 %v98, 4294901760
    %664 = vmatpush.msra.mxu0 %v663
    %v665 = vand.u32 %v97, 4294901760
    %666 = vmatpush.msra.mxu0 %v665
    %v667 = vand.u32 %v96, 4294901760
    %668 = vmatpush.msra.mxu0 %v667
    %v669 = vand.u32 %v95, 4294901760
    %670 = vmatpush.msra.mxu0 %v669
    %v671 = vand.u32 %v94, 4294901760
    %672 = vmatpush.msra.mxu0 %v671
    %v673 = vand.u32 %v93, 4294901760
    %674 = vmatpush.msra.mxu0 %v673
    %v675 = vand.u32 %v92, 4294901760
    %676 = vmatpush.msra.mxu0 %v675
    %v677 = vand.u32 %v75, 4294901760
    %v678 = vsub.f32 %v75, %v677
    %v679 = vand.u32 %v678, 4294901760
    %680 = vmatmul.f32.gmra.mxu0 %v679
    %v681 = vpop.f32.mrf.mxu0
    %v682 = vadd.f32 %v643, %v681
    %683 = vdwg.mxu0
    %v684 = vand.u32 %v107, 4294901760
    %v685 = vsub.f32 %v107, %v684
    %v686 = vand.u32 %v685, 4294901760
    %687 = vmatpush.msra.mxu0 %v686
    %v688 = vand.u32 %v106, 4294901760
    %v689 = vsub.f32 %v106, %v688
    %v690 = vand.u32 %v689, 4294901760
    %691 = vmatpush.msra.mxu0 %v690
    %v692 = vand.u32 %v105, 4294901760
    %v693 = vsub.f32 %v105, %v692
    %v694 = vand.u32 %v693, 4294901760
    %695 = vmatpush.msra.mxu0 %v694
    %v696 = vand.u32 %v104, 4294901760
    %v697 = vsub.f32 %v104, %v696
    %v698 = vand.u32 %v697, 4294901760
    %699 = vmatpush.msra.mxu0 %v698
    %v700 = vand.u32 %v103, 4294901760
    %v701 = vsub.f32 %v103, %v700
    %v702 = vand.u32 %v701, 4294901760
    %703 = vmatpush.msra.mxu0 %v702
    %v704 = vand.u32 %v102, 4294901760
    %v705 = vsub.f32 %v102, %v704
    %v706 = vand.u32 %v705, 4294901760
    %707 = vmatpush.msra.mxu0 %v706
    %v708 = vand.u32 %v101, 4294901760
    %v709 = vsub.f32 %v101, %v708
    %v710 = vand.u32 %v709, 4294901760
    %711 = vmatpush.msra.mxu0 %v710
    %v712 = vand.u32 %v100, 4294901760
    %v713 = vsub.f32 %v100, %v712
    %v714 = vand.u32 %v713, 4294901760
    %715 = vmatpush.msra.mxu0 %v714
    %v716 = vand.u32 %v99, 4294901760
    %v717 = vsub.f32 %v99, %v716
    %v718 = vand.u32 %v717, 4294901760
    %719 = vmatpush.msra.mxu0 %v718
    %v720 = vand.u32 %v98, 4294901760
    %v721 = vsub.f32 %v98, %v720
    %v722 = vand.u32 %v721, 4294901760
    %723 = vmatpush.msra.mxu0 %v722
    %v724 = vand.u32 %v97, 4294901760
    %v725 = vsub.f32 %v97, %v724
    %v726 = vand.u32 %v725, 4294901760
    %727 = vmatpush.msra.mxu0 %v726
    %v728 = vand.u32 %v96, 4294901760
    %v729 = vsub.f32 %v96, %v728
    %v730 = vand.u32 %v729, 4294901760
    %731 = vmatpush.msra.mxu0 %v730
    %v732 = vand.u32 %v95, 4294901760
    %v733 = vsub.f32 %v95, %v732
    %v734 = vand.u32 %v733, 4294901760
    %735 = vmatpush.msra.mxu0 %v734
    %v736 = vand.u32 %v94, 4294901760
    %v737 = vsub.f32 %v94, %v736
    %v738 = vand.u32 %v737, 4294901760
    %739 = vmatpush.msra.mxu0 %v738
    %v740 = vand.u32 %v93, 4294901760
    %v741 = vsub.f32 %v93, %v740
    %v742 = vand.u32 %v741, 4294901760
    %743 = vmatpush.msra.mxu0 %v742
    %v744 = vand.u32 %v92, 4294901760
    %v745 = vsub.f32 %v92, %v744
    %v746 = vand.u32 %v745, 4294901760
    %747 = vmatpush.msra.mxu0 %v746
    %v748 = vand.u32 %v75, 4294901760
    %749 = vmatmul.f32.gmra.mxu0 %v748
    %v750 = vpop.f32.mrf.mxu0
    %v751 = vadd.f32 %v682, %v750
    %752 = vdwg.mxu0
    %v753 = vand.u32 %v107, 4294901760
    %754 = vmatpush.msra.mxu0 %v753
    %v755 = vand.u32 %v106, 4294901760
    %756 = vmatpush.msra.mxu0 %v755
    %v757 = vand.u32 %v105, 4294901760
    %758 = vmatpush.msra.mxu0 %v757
    %v759 = vand.u32 %v104, 4294901760
    %760 = vmatpush.msra.mxu0 %v759
    %v761 = vand.u32 %v103, 4294901760
    %762 = vmatpush.msra.mxu0 %v761
    %v763 = vand.u32 %v102, 4294901760
    %764 = vmatpush.msra.mxu0 %v763
    %v765 = vand.u32 %v101, 4294901760
    %766 = vmatpush.msra.mxu0 %v765
    %v767 = vand.u32 %v100, 4294901760
    %768 = vmatpush.msra.mxu0 %v767
    %v769 = vand.u32 %v99, 4294901760
    %770 = vmatpush.msra.mxu0 %v769
    %v771 = vand.u32 %v98, 4294901760
    %772 = vmatpush.msra.mxu0 %v771
    %v773 = vand.u32 %v97, 4294901760
    %774 = vmatpush.msra.mxu0 %v773
    %v775 = vand.u32 %v96, 4294901760
    %776 = vmatpush.msra.mxu0 %v775
    %v777 = vand.u32 %v95, 4294901760
    %778 = vmatpush.msra.mxu0 %v777
    %v779 = vand.u32 %v94, 4294901760
    %780 = vmatpush.msra.mxu0 %v779
    %v781 = vand.u32 %v93, 4294901760
    %782 = vmatpush.msra.mxu0 %v781
    %v783 = vand.u32 %v92, 4294901760
    %784 = vmatpush.msra.mxu0 %v783
    %v785 = vand.u32 %v75, 4294901760
    %786 = vmatmul.f32.gmra.mxu0 %v785
    %v787 = vpop.f32.mrf.mxu0
    %v788 = vadd.f32 %v751, %v787
    %789 = vdwg.mxu0
    %790 = vst [vmem:[#allocation5] sm:$0xff] %v788
    // Predicated region
    $region14: #{tpu_custom_call.1} parent=1 // pred_check
      _
    $region15: #{tpu_custom_call.1} parent=1 // pred_check_branch
      %792 = sbr.rel (0) target = $region17
    $region16: #{tpu_custom_call.1} parent=1 // pred_region
      %794 = vsyncadd [#allocation4], 0
      %s796 = sshll.u32 [#allocation5], 4
      %s797 = int_to_ptr.vmem [resolvable:$true] %s796
      %s798 = sshll.u32 %s2, 4
      %s799 = int_to_ptr.hbm [resolvable:$true] %s798
      %801 = dma.vmem_to_hbm [thread:$0]  %s797, 128, %s799, [#allocation4]
    $region17: #{tpu_custom_call.1} parent=1 // pred_fallthru
      _
    // Predicated region
    $region18: #{tpu_custom_call.1} parent=1 // pred_check
      _
    $region19: #{tpu_custom_call.1} parent=1 // pred_check_branch
      %803 = sbr.rel (0) target = $region21
    $region20: #{tpu_custom_call.1} parent=1 // pred_region
      %805 = dma.done [#allocation4], 128
    $region21: #{tpu_custom_call.1} parent=1 // pred_fallthru
      _
    %806 = vsyncpa [#allocation3], 1
    %807 = vsyncpa [#allocation4], 1

</llo_original>
